<compile_context>
chip_gen: v6e
topology: v6e:2x2x1
jax: 0.10.0
libtpu: 0.0.40
codegen_flags: <defaults>
</compile_context>

<pallas_src>
import jax
import jax.numpy as jnp
from jax.experimental import pallas as pl
from jax.experimental.pallas import tpu as pltpu

SUBLANE = 8             # sublane granularity for multi-step batch tiles
MAX_BATCH_TILE = 2048   # rows per grid step (f32 in+out double-buffered ~ few MiB)
SPLIT_THRESHOLD = 1024  # above this, use >= 2 grid steps (feeds both v7x TCs)


def actor_fwd_kernel(x_ref, w1_ref, b1_ref, w2_ref, b2_ref, o_ref):
    # layer 1: tanh(x @ W1 + b1)   (MXU matmul, f32 accumulate; tanh on EUP)
    h = jnp.dot(x_ref[...], w1_ref[...], preferred_element_type=jnp.float32)
    h = jnp.tanh(h + b1_ref[...])
    # layer 2: tanh(h @ W2 + b2)
    y = jnp.dot(h, w2_ref[...], preferred_element_type=jnp.float32)
    y = jnp.tanh(y + b2_ref[...])
    o_ref[...] = y.astype(o_ref.dtype)


def _round_up(x, m):
    return ((x + m - 1) // m) * m


def _batch_tile(B):
    if B <= SPLIT_THRESHOLD:
        # Single grid step. A block dim equal to the full array dim is legal
        # even when it is not a multiple of 8, so no batch padding is needed.
        return B
    # >= 2 grid steps (axis marked "parallel" -> sharded across v7x's 2 TCs);
    # tile is a multiple of 8; the last block may be partial (Pallas clamps).
    return min(_round_up(pl.cdiv(B, 2), SUBLANE), MAX_BATCH_TILE)


@jax.jit
def actor_forward(state, w1, b1, w2, b2):
    """state: [B, state_dim] f32; w*: [in, out]; b*: [1, out] (see prepare_actor_params).

    Returns tanh(tanh(state @ w1 + b1) @ w2 + b2), shape [B, net_width].
    """
    B, state_dim = state.shape
    net_width = w1.shape[1]
    dtype = state.dtype

    tb = _batch_tile(B)
    grid = (pl.cdiv(B, tb),)

    cost = pl.CostEstimate(
        flops=2 * B * (state_dim * net_width + net_width * net_width),
        transcendentals=2 * B * net_width,
        bytes_accessed=4 * (B * state_dim + B * net_width
                            + state_dim * net_width + net_width * net_width
                            + 2 * net_width),
    )

    return pl.pallas_call(
        actor_fwd_kernel,
        out_shape=jax.ShapeDtypeStruct((B, net_width), dtype),
        grid=grid,
        in_specs=[
            # activations: one batch tile per grid step (auto double-buffered)
            pl.BlockSpec((tb, state_dim), lambda i: (i, 0)),
            # weights / biases: full (unpadded) arrays, constant index_map ->
            # VMEM-resident across grid steps.  (pl.Buffered(1) would drop the
            # redundant 2nd pipeline buffer, but at <10 KiB total it is noise.)
            pl.BlockSpec((state_dim, net_width), lambda i: (0, 0)),
            pl.BlockSpec((1, net_width), lambda i: (0, 0)),
            pl.BlockSpec((net_width, net_width), lambda i: (0, 0)),
            pl.BlockSpec((1, net_width), lambda i: (0, 0)),
        ],
        out_specs=pl.BlockSpec((tb, net_width), lambda i: (i, 0)),
        compiler_params=pltpu.CompilerParams(
            # independent batch tiles -> parallel (uses v7x's 2nd TC when >=2 steps)
            dimension_semantics=("parallel",)
        ),
        cost_estimate=cost,
    )(state, w1, b1, w2, b2)


def init_actor_params(key, state_dim, action_dim, net_width, dtype=jnp.float32):
    """Deterministic synthetic init (PyTorch-style uniform(-1/sqrt(fan_in)))."""
    k1, k2, k3, k4, k5, k6 = jax.random.split(key, 6)

    def uniform(k, shape, fan_in):
        bound = 1.0 / (fan_in ** 0.5)
        return jax.random.uniform(k, shape, dtype, -bound, bound)

    # stored as [in, out]; biases 1-D [out]
    w1 = uniform(k1, (state_dim, net_width), state_dim)
    b1 = uniform(k2, (net_width,), state_dim)
    w2 = uniform(k3, (net_width, net_width), net_width)
    b2 = uniform(k4, (net_width,), net_width)
    # l3 exists in the module but is unused by forward(); kept for parity.
    # TODO(synk): fuse l3 + softmax into the same kernel if .pi() is needed.
    w3 = uniform(k5, (net_width, action_dim), net_width)
    b3 = uniform(k6, (action_dim,), net_width)
    return w1, b1, w2, b2, w3, b3


def prepare_actor_params(w1, b1, w2, b2):
    """One-time param prep OUTSIDE the jitted hot path: biases -> (1, out) rows."""
    return w1, jnp.reshape(b1, (1, -1)), w2, jnp.reshape(b2, (1, -1))


def _reference(state, w1, b1, w2, b2):
    return jnp.tanh(jnp.tanh(state @ w1 + b1) @ w2 + b2)


if __name__ == "__main__":
    state_dim = 16
    action_dim = 4
    net_width = 32

    key = jax.random.PRNGKey(0)
    kx, kx2, kx3, kp = jax.random.split(key, 4)
    w1, b1, w2, b2, w3, b3 = init_actor_params(kp, state_dim, action_dim, net_width)
    w1p, b1p, w2p, b2p = prepare_actor_params(w1, b1, w2, b2)

    # --- small case matching the module's typical use (B=8, single grid step) ---
    batch = 8
    state = jax.random.normal(kx, (batch, state_dim), dtype=jnp.float32)
    out = jax.block_until_ready(actor_forward(state, w1p, b1p, w2p, b2p))
    ref = _reference(state, w1, b1, w2, b2)
    assert out.shape == (batch, net_width)
    assert jnp.allclose(out, ref, atol=1e-5, rtol=1e-5)

    # --- batch not a multiple of 8: exercises block dim == full array dim ---
    batch_odd = 5
    state_odd = jax.random.normal(kx3, (batch_odd, state_dim), dtype=jnp.float32)
    out_odd = jax.block_until_ready(actor_forward(state_odd, w1p, b1p, w2p, b2p))
    ref_odd = _reference(state_odd, w1, b1, w2, b2)
    assert out_odd.shape == (batch_odd, net_width)
    assert jnp.allclose(out_odd, ref_odd, atol=1e-5, rtol=1e-5)

    # --- larger batch: 2-step "parallel" grid with a partial last block ---
    batch2 = 1300
    state2 = jax.random.normal(kx2, (batch2, state_dim), dtype=jnp.float32)
    out2 = jax.block_until_ready(actor_forward(state2, w1p, b1p, w2p, b2p))
    ref2 = _reference(state2, w1, b1, w2, b2)
    assert out2.shape == (batch2, net_width)
    assert jnp.allclose(out2, ref2, atol=1e-5, rtol=1e-5)

    print("KERNEL_OK")
</pallas_src>

<mosaic_0001>
module attributes {stable_mosaic.version = 11 : i64} {
  func.func @actor_fwd_kernel(%arg0: i32, %arg1: memref<8x16xf32, #tpu.memory_space<vmem>>, %arg2: memref<16x32xf32, #tpu.memory_space<vmem>>, %arg3: memref<1x32xf32, #tpu.memory_space<vmem>>, %arg4: memref<32x32xf32, #tpu.memory_space<vmem>>, %arg5: memref<1x32xf32, #tpu.memory_space<vmem>>, %arg6: memref<8x32xf32, #tpu.memory_space<vmem>>) attributes {dimension_semantics = [#tpu.dimension_semantics<parallel>], iteration_bounds = array<i64: 1>, scalar_prefetch = 0 : i64, scratch_operands = 0 : i64, tpu.core_type = #tpu.core_type<tc>, window_params = [{transform_indices = @transform_0, window_bounds = array<i64: 8, 16>}, {pipeline_mode = #tpu.pipeline_mode<synchronous>, transform_indices = @transform_1, window_bounds = array<i64: 16, 32>}, {pipeline_mode = #tpu.pipeline_mode<synchronous>, transform_indices = @transform_2, window_bounds = array<i64: 1, 32>}, {pipeline_mode = #tpu.pipeline_mode<synchronous>, transform_indices = @transform_3, window_bounds = array<i64: 32, 32>}, {pipeline_mode = #tpu.pipeline_mode<synchronous>, transform_indices = @transform_4, window_bounds = array<i64: 1, 32>}, {transform_indices = @transform_5, window_bounds = array<i64: 8, 32>}]} {
    %c0 = arith.constant 0 : index
    %c0_0 = arith.constant 0 : index
    %0 = vector.load %arg1[%c0, %c0_0] : memref<8x16xf32, #tpu.memory_space<vmem>>, vector<8x16xf32>
    %c0_1 = arith.constant 0 : index
    %c0_2 = arith.constant 0 : index
    %1 = vector.load %arg2[%c0_1, %c0_2] : memref<16x32xf32, #tpu.memory_space<vmem>>, vector<16x32xf32>
    %cst = arith.constant dense<0.000000e+00> : vector<8x32xf32>
    %2 = tpu.matmul %0, %1, %cst {dimension_numbers = #tpu.dot_dimension_numbers<[1], [0], [0], [1], [0, 0, 1, 1], [], []>} : vector<8x16xf32>, vector<16x32xf32>, vector<8x32xf32> -> vector<8x32xf32>
    %c0_3 = arith.constant 0 : index
    %c0_4 = arith.constant 0 : index
    %3 = vector.load %arg3[%c0_3, %c0_4] : memref<1x32xf32, #tpu.memory_space<vmem>>, vector<1x32xf32>
    %4 = vector.broadcast %3 : vector<1x32xf32> to vector<8x32xf32>
    %5 = arith.addf %2, %4 : vector<8x32xf32>
    %6 = math.tanh %5 : vector<8x32xf32>
    %c0_5 = arith.constant 0 : index
    %c0_6 = arith.constant 0 : index
    %7 = vector.load %arg4[%c0_5, %c0_6] : memref<32x32xf32, #tpu.memory_space<vmem>>, vector<32x32xf32>
    %cst_7 = arith.constant dense<0.000000e+00> : vector<8x32xf32>
    %8 = tpu.matmul %6, %7, %cst_7 {dimension_numbers = #tpu.dot_dimension_numbers<[1], [0], [0], [1], [0, 0, 1, 1], [], []>} : vector<8x32xf32>, vector<32x32xf32>, vector<8x32xf32> -> vector<8x32xf32>
    %c0_8 = arith.constant 0 : index
    %c0_9 = arith.constant 0 : index
    %9 = vector.load %arg5[%c0_8, %c0_9] : memref<1x32xf32, #tpu.memory_space<vmem>>, vector<1x32xf32>
    %10 = vector.broadcast %9 : vector<1x32xf32> to vector<8x32xf32>
    %11 = arith.addf %8, %10 : vector<8x32xf32>
    %12 = math.tanh %11 : vector<8x32xf32>
    %c0_10 = arith.constant 0 : index
    %c0_11 = arith.constant 0 : index
    %13 = vector.load %arg6[%c0_10, %c0_11] : memref<8x32xf32, #tpu.memory_space<vmem>>, vector<8x32xf32>
    tpu.vector_store %arg6[%c0_10, %c0_11], %12 {strides = array<i32>} : memref<8x32xf32, #tpu.memory_space<vmem>>, vector<8x32xf32>,
    return
  }
  func.func @transform_0(%arg0: i32) -> (i32, i32) {
    %c0_i32 = arith.constant 0 : i32
    %c0_i32_0 = arith.constant 0 : i32
    return %arg0, %c0_i32 : i32, i32
  }
  func.func @transform_1(%arg0: i32) -> (i32, i32) {
    %c0_i32 = arith.constant 0 : i32
    %c0_i32_0 = arith.constant 0 : i32
    %c0_i32_1 = arith.constant 0 : i32
    return %c0_i32, %c0_i32_0 : i32, i32
  }
  func.func @transform_2(%arg0: i32) -> (i32, i32) {
    %c0_i32 = arith.constant 0 : i32
    %c0_i32_0 = arith.constant 0 : i32
    %c0_i32_1 = arith.constant 0 : i32
    return %c0_i32, %c0_i32_0 : i32, i32
  }
  func.func @transform_3(%arg0: i32) -> (i32, i32) {
    %c0_i32 = arith.constant 0 : i32
    %c0_i32_0 = arith.constant 0 : i32
    %c0_i32_1 = arith.constant 0 : i32
    return %c0_i32, %c0_i32_0 : i32, i32
  }
  func.func @transform_4(%arg0: i32) -> (i32, i32) {
    %c0_i32 = arith.constant 0 : i32
    %c0_i32_0 = arith.constant 0 : i32
    %c0_i32_1 = arith.constant 0 : i32
    return %c0_i32, %c0_i32_0 : i32, i32
  }
  func.func @transform_5(%arg0: i32) -> (i32, i32) {
    %c0_i32 = arith.constant 0 : i32
    %c0_i32_0 = arith.constant 0 : i32
    return %arg0, %c0_i32 : i32, i32
  }
}

</mosaic_0001>

<llo_original>
// kernel: actor_forward.1
$region0: #{actor_forward.1}
  #allocation0 [shape = 'u32[]', space=smem, size = 0x4, offset = 0x4, fixed_abs, tag = 'smem constant byte address 0x4 - core index']
  #allocation1 [shape = 'u32[144,128]{1,0:T(1,128)}', space=vmem, size = 0x12000, scoped, tag = 'internal scratch']
  %s0 = inlined_call_operand.hbm [shape: f32[8,16], index: 0, kind: input, shape index: {}]
  %s1 = inlined_call_operand.hbm [shape: f32[16,32], index: 1, kind: input, shape index: {}]
  %s2 = inlined_call_operand.vmem [shape: f32[1,32], index: 2, kind: input, shape index: {}]
  %s3 = inlined_call_operand.hbm [shape: f32[32,32], index: 3, kind: input, shape index: {}]
  %s4 = inlined_call_operand.vmem [shape: f32[1,32], index: 4, kind: input, shape index: {}]
  %s5 = inlined_call_operand.hbm [shape: f32[8,32], index: 5, kind: output, shape index: {}]
  %s6 = sld [smem:[#allocation0]]
  $region42: #{actor_forward.1} parent=0
    _
  %s8 = ssub.s32 1, %s6
  %s9 = scalar_select 0, %s8, %s6
  $region1: #{actor_forward.1} parent=0
    #allocation2 [shape = 'u8[4096]{0}', space=vmem, size = 0x1000, scoped, tag = 'input window, operand 0, single buffered']
    #allocation3 [shape = 's32[1]{0}', space=sflag, size = 0x4, scoped, tag = 'scoped memory for actor_forward.1']
    #allocation4 [shape = 's32[1]{0}', space=sflag, size = 0x4, scoped, tag = 'scoped memory for actor_forward.1']
    #allocation5 [shape = 'u8[8192]{0}', space=vmem, size = 0x2000, scoped, tag = 'input window, operand 1, single buffered']
    #allocation6 [shape = 's32[1]{0}', space=sflag, size = 0x4, scoped, tag = 'scoped memory for actor_forward.1']
    #allocation7 [shape = 'u8[16384]{0}', space=vmem, size = 0x4000, scoped, tag = 'input window, operand 3, single buffered']
    #allocation8 [shape = 'u8[4096]{0}', space=vmem, size = 0x1000, scoped, tag = 'output window, operand 0, single buffered']
    %10 = vsyncpa [#allocation3], 0
    %11 = vsyncpa [#allocation6], 0
    %12 = vsyncpa [#allocation4], 0
    // Predicated region
    $region2: #{actor_forward.1} parent=1 // pred_check
      _
    $region3: #{actor_forward.1} parent=1 // pred_check_branch
      %14 = sbr.rel (0) target = $region5
    $region4: #{actor_forward.1} parent=1 // pred_region
      %s16 = ssub.s32 128, 128
      %17 = vsyncadd [#allocation3], %s16
      %s19 = sshll.u32 [#allocation2], 4
      %s20 = int_to_ptr.vmem [resolvable:$true] %s19
      %22 = dma.hbm_to_vmem [thread:$0]  %s0, 128, %s20, [#allocation3]
    $region5: #{actor_forward.1} parent=1 // pred_fallthru
      _
    // Predicated region
    $region6: #{actor_forward.1} parent=1 // pred_check
      _
    $region7: #{actor_forward.1} parent=1 // pred_check_branch
      %24 = sbr.rel (0) target = $region9
    $region8: #{actor_forward.1} parent=1 // pred_region
      %s26 = ssub.s32 256, 256
      %27 = vsyncadd [#allocation6], %s26
      %s28 = sshll.u32 [#allocation5], 4
      %s29 = int_to_ptr.vmem [resolvable:$true] %s28
      %34 = dma.hbm_to_vmem [thread:$0]  %s1, 256, %s29, [#allocation6], 128, 128, 8
    $region9: #{actor_forward.1} parent=1 // pred_fallthru
      _
    // Predicated region
    $region10: #{actor_forward.1} parent=1 // pred_check
      _
    $region11: #{actor_forward.1} parent=1 // pred_check_branch
      %36 = sbr.rel (0) target = $region13
    $region12: #{actor_forward.1} parent=1 // pred_region
      _
    $region13: #{actor_forward.1} parent=1 // pred_fallthru
      _
    // Predicated region
    $region14: #{actor_forward.1} parent=1 // pred_check
      _
    $region15: #{actor_forward.1} parent=1 // pred_check_branch
      %38 = sbr.rel (0) target = $region17
    $region16: #{actor_forward.1} parent=1 // pred_region
      %s40 = ssub.s32 512, 512
      %41 = vsyncadd [#allocation6], %s40
      %s42 = sshll.u32 [#allocation7], 4
      %s43 = int_to_ptr.vmem [resolvable:$true] %s42
      %48 = dma.hbm_to_vmem [thread:$0]  %s3, 512, %s43, [#allocation6], 128, 128, 8
    $region17: #{actor_forward.1} parent=1 // pred_fallthru
      _
    // Predicated region
    $region18: #{actor_forward.1} parent=1 // pred_check
      _
    $region19: #{actor_forward.1} parent=1 // pred_check_branch
      %50 = sbr.rel (0) target = $region21
    $region20: #{actor_forward.1} parent=1 // pred_region
      _
    $region21: #{actor_forward.1} parent=1 // pred_fallthru
      _
    // Predicated region
    $region22: #{actor_forward.1} parent=1 // pred_check
      _
    $region23: #{actor_forward.1} parent=1 // pred_check_branch
      %52 = sbr.rel (0) target = $region25
    $region24: #{actor_forward.1} parent=1 // pred_region
      %53 = dma.done [#allocation3], 128
    $region25: #{actor_forward.1} parent=1 // pred_fallthru
      _
    // Predicated region
    $region26: #{actor_forward.1} parent=1 // pred_check
      _
    $region27: #{actor_forward.1} parent=1 // pred_check_branch
      %55 = sbr.rel (0) target = $region29
    $region28: #{actor_forward.1} parent=1 // pred_region
      %56 = dma.done [#allocation6], 256
    $region29: #{actor_forward.1} parent=1 // pred_fallthru
      _
    // Predicated region
    $region30: #{actor_forward.1} parent=1 // pred_check
      _
    $region31: #{actor_forward.1} parent=1 // pred_check_branch
      %58 = sbr.rel (0) target = $region33
    $region32: #{actor_forward.1} parent=1 // pred_region
      %59 = dma.done [#allocation6], 512
    $region33: #{actor_forward.1} parent=1 // pred_fallthru
      _
    %v60 = vld [vmem:[#allocation2] sm:$0xff]
    %v61 = vld [vmem:[#allocation5] sm:$0xff]
    %v62 = vld [vmem:[#allocation5 + $0x8] sm:$0xff]
    %v63 = vld [vmem:[%s2] sm:$0x1]
    %v65 = vlaneseq
    %v66 = vshrl.u32 %v65, 7
    %v67 = vsub.s32 0, %v66
    %v68 = vrot.slane %v63, %v67
    %vm70 = vcmask 130048
    %v72 = vsel %vm70, %v60, 0
    %74 = vmatprep.subr.mxu0 0.0
    %75 = vmatpush1.msra.mxu0 0.0
    %76 = vmatprep.subr.mxu0 0.0
    %77 = vmatpush1.msra.mxu0 0.0
    %78 = vmatprep.subr.mxu0 0.0
    %79 = vmatpush1.msra.mxu0 0.0
    %80 = vmatprep.subr.mxu0 0.0
    %81 = vmatpush1.msra.mxu0 0.0
    %82 = vmatprep.subr.mxu0 0.0
    %83 = vmatpush1.msra.mxu0 0.0
    %84 = vmatprep.subr.mxu0 0.0
    %85 = vmatpush1.msra.mxu0 0.0
    %86 = vmatprep.subr.mxu0 0.0
    %87 = vmatpush1.msra.mxu0 0.0
    %88 = vmatprep.subr.mxu0 0.0
    %89 = vmatpush1.msra.mxu0 0.0
    %90 = vmatprep.subr.mxu0 0.0
    %91 = vmatpush1.msra.mxu0 0.0
    %92 = vmatprep.subr.mxu0 0.0
    %93 = vmatpush1.msra.mxu0 0.0
    %94 = vmatprep.subr.mxu0 0.0
    %95 = vmatpush1.msra.mxu0 0.0
    %96 = vmatprep.subr.mxu0 0.0
    %97 = vmatpush1.msra.mxu0 0.0
    %98 = vmatprep.subr.mxu0 0.0
    %99 = vmatpush1.msra.mxu0 0.0
    %100 = vmatprep.subr.mxu0 0.0
    %101 = vmatpush1.msra.mxu0 0.0
    %102 = vmatprep.subr.mxu0 0.0
    %103 = vmatpush1.msra.mxu0 %v62
    %104 = vmatprep.subr.mxu0 0.0
    %105 = vmatpush1.msra.mxu0 %v61
    %106 = vmatprep.subr.mxu0 0.0
    %107 = vmatpush2.msra.mxu0 0.0
    %108 = vmatprep.subr.mxu0 0.0
    %109 = vmatpush2.msra.mxu0 0.0
    %110 = vmatprep.subr.mxu0 0.0
    %111 = vmatpush2.msra.mxu0 0.0
    %112 = vmatprep.subr.mxu0 0.0
    %113 = vmatpush2.msra.mxu0 0.0
    %114 = vmatprep.subr.mxu0 0.0
    %115 = vmatpush2.msra.mxu0 0.0
    %116 = vmatprep.subr.mxu0 0.0
    %117 = vmatpush2.msra.mxu0 0.0
    %118 = vmatprep.subr.mxu0 0.0
    %119 = vmatpush2.msra.mxu0 0.0
    %120 = vmatprep.subr.mxu0 0.0
    %121 = vmatpush2.msra.mxu0 0.0
    %122 = vmatprep.subr.mxu0 0.0
    %123 = vmatpush2.msra.mxu0 0.0
    %124 = vmatprep.subr.mxu0 0.0
    %125 = vmatpush2.msra.mxu0 0.0
    %126 = vmatprep.subr.mxu0 0.0
    %127 = vmatpush2.msra.mxu0 0.0
    %128 = vmatprep.subr.mxu0 0.0
    %129 = vmatpush2.msra.mxu0 0.0
    %130 = vmatprep.subr.mxu0 0.0
    %131 = vmatpush2.msra.mxu0 0.0
    %132 = vmatprep.subr.mxu0 0.0
    %133 = vmatpush2.msra.mxu0 0.0
    %134 = vmatprep.subr.mxu0 0.0
    %135 = vmatpush2.msra.mxu0 0.0
    %136 = vmatprep.subr.mxu0 0.0
    %137 = vmatpush2.msra.mxu0 0.0
    %138 = vmatprep.mubr.f32.mxu0 0.0
    %139 = vmatmul.mubr.f32.gmra.mxu0 %v72
    %v140 = vpop.f32.mrf.mxu0
    %v141 = vadd.f32 %v68, %v140
    %v142 = vpop.f32.mrf.mxu0
    %143 = vdwg.mxu0
    %v144 = vtanh.pop %v141
    %v145 = vld [vmem:[#allocation7] sm:$0xff]
    %v146 = vld [vmem:[#allocation7 + $0x8] sm:$0xff]
    %v147 = vld [vmem:[#allocation7 + $0x10] sm:$0xff]
    %v148 = vld [vmem:[#allocation7 + $0x18] sm:$0xff]
    %v149 = vld [vmem:[%s4] sm:$0x1]
    %v151 = vlaneseq
    %v152 = vshrl.u32 %v151, 7
    %v153 = vsub.s32 0, %v152
    %v154 = vrot.slane %v149, %v153
    %vm156 = vcmask 261120
    %v158 = vsel %vm156, %v144, 0
    %160 = vmatprep.subr.mxu0 0.0
    %161 = vmatpush1.msra.mxu0 0.0
    %162 = vmatprep.subr.mxu0 0.0
    %163 = vmatpush1.msra.mxu0 0.0
    %164 = vmatprep.subr.mxu0 0.0
    %165 = vmatpush1.msra.mxu0 0.0
    %166 = vmatprep.subr.mxu0 0.0
    %167 = vmatpush1.msra.mxu0 0.0
    %168 = vmatprep.subr.mxu0 0.0
    %169 = vmatpush1.msra.mxu0 0.0
    %170 = vmatprep.subr.mxu0 0.0
    %171 = vmatpush1.msra.mxu0 0.0
    %172 = vmatprep.subr.mxu0 0.0
    %173 = vmatpush1.msra.mxu0 0.0
    %174 = vmatprep.subr.mxu0 0.0
    %175 = vmatpush1.msra.mxu0 0.0
    %176 = vmatprep.subr.mxu0 0.0
    %177 = vmatpush1.msra.mxu0 0.0
    %178 = vmatprep.subr.mxu0 0.0
    %179 = vmatpush1.msra.mxu0 0.0
    %180 = vmatprep.subr.mxu0 0.0
    %181 = vmatpush1.msra.mxu0 0.0
    %182 = vmatprep.subr.mxu0 0.0
    %183 = vmatpush1.msra.mxu0 0.0
    %184 = vmatprep.subr.mxu0 0.0
    %185 = vmatpush1.msra.mxu0 %v148
    %186 = vmatprep.subr.mxu0 0.0
    %187 = vmatpush1.msra.mxu0 %v147
    %188 = vmatprep.subr.mxu0 0.0
    %189 = vmatpush1.msra.mxu0 %v146
    %190 = vmatprep.subr.mxu0 0.0
    %191 = vmatpush1.msra.mxu0 %v145
    %192 = vmatprep.subr.mxu0 0.0
    %193 = vmatpush2.msra.mxu0 0.0
    %194 = vmatprep.subr.mxu0 0.0
    %195 = vmatpush2.msra.mxu0 0.0
    %196 = vmatprep.subr.mxu0 0.0
    %197 = vmatpush2.msra.mxu0 0.0
    %198 = vmatprep.subr.mxu0 0.0
    %199 = vmatpush2.msra.mxu0 0.0
    %200 = vmatprep.subr.mxu0 0.0
    %201 = vmatpush2.msra.mxu0 0.0
    %202 = vmatprep.subr.mxu0 0.0
    %203 = vmatpush2.msra.mxu0 0.0
    %204 = vmatprep.subr.mxu0 0.0
    %205 = vmatpush2.msra.mxu0 0.0
    %206 = vmatprep.subr.mxu0 0.0
    %207 = vmatpush2.msra.mxu0 0.0
    %208 = vmatprep.subr.mxu0 0.0
    %209 = vmatpush2.msra.mxu0 0.0
    %210 = vmatprep.subr.mxu0 0.0
    %211 = vmatpush2.msra.mxu0 0.0
    %212 = vmatprep.subr.mxu0 0.0
    %213 = vmatpush2.msra.mxu0 0.0
    %214 = vmatprep.subr.mxu0 0.0
    %215 = vmatpush2.msra.mxu0 0.0
    %216 = vmatprep.subr.mxu0 0.0
    %217 = vmatpush2.msra.mxu0 0.0
    %218 = vmatprep.subr.mxu0 0.0
    %219 = vmatpush2.msra.mxu0 0.0
    %220 = vmatprep.subr.mxu0 0.0
    %221 = vmatpush2.msra.mxu0 0.0
    %222 = vmatprep.subr.mxu0 0.0
    %223 = vmatpush2.msra.mxu0 0.0
    %224 = vmatprep.mubr.f32.mxu0 0.0
    %225 = vmatmul.mubr.f32.gmra.mxu0 %v158
    %v226 = vpop.f32.mrf.mxu0
    %v227 = vadd.f32 %v154, %v226
    %v228 = vpop.f32.mrf.mxu0
    %229 = vdwg.mxu0
    %v230 = vtanh.pop %v227
    %231 = vst.msk [vmem:[#allocation8] sm:$0xff] %vm156, %v230
    // Predicated region
    $region34: #{actor_forward.1} parent=1 // pred_check
      _
    $region35: #{actor_forward.1} parent=1 // pred_check_branch
      %233 = sbr.rel (0) target = $region37
    $region36: #{actor_forward.1} parent=1 // pred_region
      %s235 = ssub.s32 128, 128
      %236 = vsyncadd [#allocation4], %s235
      %s238 = sshll.u32 [#allocation8], 4
      %s239 = int_to_ptr.vmem [resolvable:$true] %s238
      %241 = dma.vmem_to_hbm [thread:$0]  %s239, 128, %s5, [#allocation4]
    $region37: #{actor_forward.1} parent=1 // pred_fallthru
      _
    // Predicated region
    $region38: #{actor_forward.1} parent=1 // pred_check
      _
    $region39: #{actor_forward.1} parent=1 // pred_check_branch
      %243 = sbr.rel (0) target = $region41
    $region40: #{actor_forward.1} parent=1 // pred_region
      %244 = dma.done [#allocation4], 128
    $region41: #{actor_forward.1} parent=1 // pred_fallthru
      _
    %245 = vsyncpa [#allocation3], 1
    %246 = vsyncpa [#allocation6], 1
    %247 = vsyncpa [#allocation4], 1

</llo_original>
